<compile_context>
chip_gen: v7x
topology: tpu7x:2x2x1
jax: 0.10.0
libtpu: 0.0.40
codegen_flags: <defaults>
</compile_context>

<pallas_src>
import jax
import jax.numpy as jnp
from jax.experimental import pallas as pl
from jax.experimental.pallas import tpu as pltpu


# ------------------------------- Pallas kernel -------------------------------

def _dummy_layer_kernel(x_ref, w_ref, o_ref):
    # x_ref: (rows, D)  speaker vectors (one tile of the flattened batch)
    # w_ref: (1, D)     nn.Linear(spk_num -> 1, bias=False) weight
    # o_ref: (rows, 1)  ReLU(x @ w.T)
    x = x_ref[...].astype(jnp.float32)
    w = w_ref[...].astype(jnp.float32)
    acc = jnp.sum(x * w, axis=-1, keepdims=True)      # (rows, 1) f32, out_features == 1
    o_ref[...] = jnp.maximum(acc, 0.0).astype(o_ref.dtype)


# ------------------------------- wrapper --------------------------------------

def dummy_layer_forward(spk_vec, weight, *, block_rows=256):
    """DummyLayer.forward: ReLU(spk_vec @ weight.T), weight shape (1, spk_num), no bias.

    Accepts any leading batch dims (like torch.nn.Linear); returns shape (..., 1).
    """
    orig_shape = spk_vec.shape
    d = orig_shape[-1]
    x2 = spk_vec.reshape(-1, d)
    n = x2.shape[0]

    rows = max(1, min(block_rows, n))
    n_pad = ((n + rows - 1) // rows) * rows
    if n_pad != n:
        x2 = jnp.concatenate([x2, jnp.zeros((n_pad - n, d), x2.dtype)], axis=0)

    out = pl.pallas_call(
        _dummy_layer_kernel,
        out_shape=jax.ShapeDtypeStruct((n_pad, 1), spk_vec.dtype),
        grid=(n_pad // rows,),
        in_specs=[
            pl.BlockSpec((rows, d), lambda i: (i, 0)),
            pl.BlockSpec((1, d), lambda i: (0, 0)),
        ],
        out_specs=pl.BlockSpec((rows, 1), lambda i: (i, 0)),
        compiler_params=pltpu.CompilerParams(dimension_semantics=("parallel",)),
    )(x2, weight)

    out = out[:n]
    return out.reshape(*orig_shape[:-1], 1)


# ------------------------------- example / check ------------------------------

if __name__ == "__main__":
    key = jax.random.PRNGKey(0)
    k_w, k_x, k_x3 = jax.random.split(key, 3)

    N, spk_num = 2, 4
    # DummyLayer parameters: nn.Linear(spk_num, 1, bias=False) -> weight (1, spk_num)
    weight = 0.1 * jax.random.normal(k_w, (1, spk_num), dtype=jnp.float32)

    # Example speaker vectors (both signs so ReLU is exercised).
    spk_vec = jax.random.normal(k_x, (N, spk_num), dtype=jnp.float32)

    fwd = jax.jit(lambda x: dummy_layer_forward(x, weight))
    out = fwd(spk_vec)
    jax.block_until_ready(out)

    # Pure-JAX reference.
    ref = jnp.maximum(spk_vec @ weight.T, 0.0)
    assert out.shape == (N, 1)
    assert jnp.allclose(out, ref, atol=1e-6, rtol=1e-6)

    # Also exercise extra leading batch dims, like torch.nn.Linear broadcasting.
    spk_vec3 = jax.random.normal(k_x3, (N, 3, spk_num), dtype=jnp.float32)
    out3 = jax.block_until_ready(dummy_layer_forward(spk_vec3, weight))
    ref3 = jnp.maximum(spk_vec3 @ weight.T, 0.0)
    assert out3.shape == (N, 3, 1)
    assert jnp.allclose(out3, ref3, atol=1e-6, rtol=1e-6)

    print("KERNEL_OK")
</pallas_src>

<mosaic_0001>
module attributes {stable_mosaic.version = 11 : i64} {
  func.func @_dummy_layer_kernel(%arg0: i32, %arg1: memref<2x4xf32, #tpu.memory_space<vmem>>, %arg2: memref<1x4xf32, #tpu.memory_space<vmem>>, %arg3: memref<2x1xf32, #tpu.memory_space<vmem>>) attributes {dimension_semantics = [#tpu.dimension_semantics<parallel>], iteration_bounds = array<i64: 1>, scalar_prefetch = 0 : i64, scratch_operands = 0 : i64, tpu.core_type = #tpu.core_type<tc>, window_params = [{transform_indices = @transform_0, window_bounds = array<i64: 2, 4>}, {pipeline_mode = #tpu.pipeline_mode<synchronous>, transform_indices = @transform_1, window_bounds = array<i64: 1, 4>}, {transform_indices = @transform_2, window_bounds = array<i64: 2, 1>}]} {
    %c0 = arith.constant 0 : index
    %c0_0 = arith.constant 0 : index
    %0 = vector.load %arg1[%c0, %c0_0] : memref<2x4xf32, #tpu.memory_space<vmem>>, vector<2x4xf32>
    %c0_1 = arith.constant 0 : index
    %c0_2 = arith.constant 0 : index
    %1 = vector.load %arg2[%c0_1, %c0_2] : memref<1x4xf32, #tpu.memory_space<vmem>>, vector<1x4xf32>
    %2 = vector.broadcast %1 : vector<1x4xf32> to vector<2x4xf32>
    %3 = arith.mulf %0, %2 : vector<2x4xf32>
    %cst = arith.constant dense<0.000000e+00> : vector<2xf32>
    %4 = vector.multi_reduction <add>, %3, %cst [1] : vector<2x4xf32> to vector<2xf32>
    %5 = vector.shape_cast %4 : vector<2xf32> to vector<2x1xf32>
    %cst_3 = arith.constant 0.000000e+00 : f32
    %6 = vector.broadcast %cst_3 : f32 to vector<2x1xf32>
    %7 = arith.maximumf %5, %6 : vector<2x1xf32>
    %c0_4 = arith.constant 0 : index
    %c0_5 = arith.constant 0 : index
    %8 = vector.load %arg3[%c0_4, %c0_5] : memref<2x1xf32, #tpu.memory_space<vmem>>, vector<2x1xf32>
    tpu.vector_store %arg3[%c0_4, %c0_5], %7 {strides = array<i32>} : memref<2x1xf32, #tpu.memory_space<vmem>>, vector<2x1xf32>,
    return
  }
  func.func @transform_0(%arg0: i32) -> (i32, i32) {
    %c0_i32 = arith.constant 0 : i32
    %c0_i32_0 = arith.constant 0 : i32
    return %arg0, %c0_i32 : i32, i32
  }
  func.func @transform_1(%arg0: i32) -> (i32, i32) {
    %c0_i32 = arith.constant 0 : i32
    %c0_i32_0 = arith.constant 0 : i32
    %c0_i32_1 = arith.constant 0 : i32
    return %c0_i32, %c0_i32_0 : i32, i32
  }
  func.func @transform_2(%arg0: i32) -> (i32, i32) {
    %c0_i32 = arith.constant 0 : i32
    %c0_i32_0 = arith.constant 0 : i32
    return %arg0, %c0_i32 : i32, i32
  }
}

</mosaic_0001>

<llo_original>
// kernel: _lambda_.1
$region0: #{_lambda_.1}
  #allocation0 [shape = 'u32[]', space=smem, size = 0x4, offset = 0x4, fixed_abs, tag = 'smem constant byte address 0x4 - core index']
  #allocation1 [shape = 'u32[144,128]{1,0:T(1,128)}', space=vmem, size = 0x12000, scoped, tag = 'internal scratch']
  %s0 = inlined_call_operand.hbm [shape: f32[2,4], index: 0, kind: input, shape index: {}]
  %s1 = inlined_call_operand.vmem [shape: f32[1,4], index: 1, kind: input, shape index: {}]
  %s2 = inlined_call_operand.vmem [shape: f32[2,1], index: 2, kind: output, shape index: {}]
  %s3 = sld [smem:[#allocation0]]
  $region22: #{_lambda_.1} parent=0
    _
  %s5 = ssub.s32 1, %s3
  %s6 = scalar_select 0, %s5, %s3
  $region1: #{_lambda_.1} parent=0
    #allocation2 [shape = 'u8[1024]{0}', space=vmem, size = 0x400, scoped, tag = 'input window, operand 0, single buffered']
    #allocation3 [shape = 's32[1]{0}', space=sflag, size = 0x4, scoped, tag = 'scoped memory for _lambda_.1']
    %7 = vsyncpa [#allocation3], 0
    // Predicated region
    $region2: #{_lambda_.1} parent=1 // pred_check
      _
    $region3: #{_lambda_.1} parent=1 // pred_check_branch
      %9 = sbr.rel (0) target = $region5
    $region4: #{_lambda_.1} parent=1 // pred_region
      %s11 = ssub.s32 32, 32
      %12 = vsyncadd [#allocation3], %s11
      %s14 = sshll.u32 [#allocation2], 4
      %s15 = int_to_ptr.vmem [resolvable:$true] %s14
      %17 = dma.hbm_to_vmem [thread:$0]  %s0, 32, %s15, [#allocation3]
    $region5: #{_lambda_.1} parent=1 // pred_fallthru
      _
    // Predicated region
    $region6: #{_lambda_.1} parent=1 // pred_check
      _
    $region7: #{_lambda_.1} parent=1 // pred_check_branch
      %19 = sbr.rel (0) target = $region9
    $region8: #{_lambda_.1} parent=1 // pred_region
      _
    $region9: #{_lambda_.1} parent=1 // pred_fallthru
      _
    // Predicated region
    $region10: #{_lambda_.1} parent=1 // pred_check
      _
    $region11: #{_lambda_.1} parent=1 // pred_check_branch
      %21 = sbr.rel (0) target = $region13
    $region12: #{_lambda_.1} parent=1 // pred_region
      %22 = dma.done [#allocation3], 32
    $region13: #{_lambda_.1} parent=1 // pred_fallthru
      _
    %v23 = vld [vmem:[#allocation2] sm:$0x3]
    %v24 = vld [vmem:[%s1] sm:$0x1]
    %v26 = vlaneseq
    %v27 = vshrl.u32 %v26, 7
    %v28 = vsub.s32 0, %v27
    %v29 = vrot.slane %v24, %v28
    %v31 = vmul.f32 %v23, %v29
    %vm32 = vcmask 25600
    %v33 = vsel %vm32, %v31, 0.0
    %34 = vadd.xlane.f32.xlu0 %v33
    %v35 = vpop.xlane.xlu0 %34
    %v36 = vmax.f32 %v35, 0.0
    %vm37 = vcmask 1024
    %38 = vst.msk [vmem:[%s2] sm:$0x3] %vm37, %v36
    // Predicated region
    $region14: #{_lambda_.1} parent=1 // pred_check
      _
    $region15: #{_lambda_.1} parent=1 // pred_check_branch
      %40 = sbr.rel (0) target = $region17
    $region16: #{_lambda_.1} parent=1 // pred_region
      _
    $region17: #{_lambda_.1} parent=1 // pred_fallthru
      _
    // Predicated region
    $region18: #{_lambda_.1} parent=1 // pred_check
      _
    $region19: #{_lambda_.1} parent=1 // pred_check_branch
      %42 = sbr.rel (0) target = $region21
    $region20: #{_lambda_.1} parent=1 // pred_region
      _
    $region21: #{_lambda_.1} parent=1 // pred_fallthru
      _
    %43 = vsyncpa [#allocation3], 1

</llo_original>
